<compile_context>
chip_gen: v6e
topology: v6e:2x2x1
jax: 0.10.0
libtpu: 0.0.40
codegen_flags: <defaults>
</compile_context>

<pallas_src>
import functools

import jax
import jax.numpy as jnp
from jax import lax
from jax.experimental import pallas as pl
from jax.experimental.pallas import tpu as pltpu


def _round_up(x, m):
    return (x + m - 1) // m * m


def _vmem_estimate(c_in_p, c_out, kc, l_tile, lb_in, halo_blk, dtype):
    isz = jnp.dtype(dtype).itemsize
    # double-buffered pipelined blocks (inputs + output tile + tiny vectors)
    bufs = 2 * isz * (c_in_p * (lb_in + halo_blk) + c_out * kc + 4 * c_out)
    bufs += 2 * isz * c_out * l_tile
    # in-kernel temporaries (window, im2col slab, f32 conv tile), generous factor
    work = 4 * (c_in_p * (lb_in + halo_blk) + kc * l_tile + 2 * c_out * l_tile) * 2
    total = bufs + work + (4 << 20)
    return int(min(max(total, 16 << 20), 64 << 20))


def _conv_tile(x_ref, xh_ref, w_ref, *, ksize, stride, dilation, l_tile):
    """One conv output tile, (C_out, L_TILE) f32.  Conv bias is NOT included —
    it cancels exactly under training-mode BatchNorm (constant shift per channel)."""
    xa = x_ref[0]                                   # (C_in_p, L_TILE*stride), 128-aligned lanes
    xh = xh_ref[0]                                  # (C_in_p, HALO_BLK)
    window = jnp.concatenate([xa, xh], axis=1)      # cheap lane concat (xa is 128-aligned)
    span = (l_tile - 1) * stride + 1
    # All tap slices are static (k, dilation, stride are compile-time constants).
    taps = [window[:, k * dilation: k * dilation + span: stride] for k in range(ksize)]
    slab = taps[0] if ksize == 1 else jnp.concatenate(taps, axis=0)   # (K*C_in_p, L_TILE)
    return lax.dot_general(w_ref[...], slab,
                           dimension_numbers=(((1,), (0,)), ((), ())),
                           preferred_element_type=jnp.float32)        # (C_out, L_TILE)


def _stats_kernel(x_ref, xh_ref, w_ref, sum_ref, sq_ref, *,
                  ksize, stride, dilation, l_tile, l_out):
    n_i = pl.program_id(0)
    j = pl.program_id(1)

    @pl.when((n_i == 0) & (j == 0))
    def _():
        sum_ref[...] = jnp.zeros_like(sum_ref)
        sq_ref[...] = jnp.zeros_like(sq_ref)

    y = _conv_tile(x_ref, xh_ref, w_ref, ksize=ksize, stride=stride,
                   dilation=dilation, l_tile=l_tile)                  # (C_out, L_TILE) f32

    # Mask columns past L_out (tail tile) so they don't pollute the batch stats
    # (they are computed from partially-real data at the right edge).
    col = lax.broadcasted_iota(jnp.int32, (1, l_tile), 1)
    valid = col < (l_out - j * l_tile)
    yv = jnp.where(valid, y, 0.0)

    sum_ref[...] += jnp.sum(yv, axis=1, keepdims=True)
    sq_ref[...] += jnp.sum(yv * yv, axis=1, keepdims=True)


def _apply_kernel(x_ref, xh_ref, w_ref, scale_ref, shift_ref, o_ref, *,
                  ksize, stride, dilation, l_tile):
    y = _conv_tile(x_ref, xh_ref, w_ref, ksize=ksize, stride=stride,
                   dilation=dilation, l_tile=l_tile)
    y = y * scale_ref[...] + shift_ref[...]         # bias/mean/gamma/beta all folded in
    o_ref[0] = y.astype(o_ref.dtype)


def conv_norm_1d(x, weight, bias, gamma, beta, *, stride=1, padding=0,
                 dilation=1, eps=1e-5, l_tile=512):
    """x: (N, C_in, L) PyTorch NCL. Returns (N, C_out, L_out) NCL.

    Conv1d(groups=1) + BatchNorm1d with batch statistics (training mode).
    `bias` is accepted for API fidelity but has no effect on the output:
    (conv + b - mean(conv + b)) == (conv - mean(conv)) exactly.
    """
    n, c_in, l = x.shape
    c_out, c_in_w, k = weight.shape
    assert c_in == c_in_w, "groups=1 only"  # TODO(synk): grouped conv not implemented
    del bias  # cancels under training-mode BatchNorm

    l_out = (l + 2 * padding - dilation * (k - 1) - 1) // stride + 1
    assert l_out > 0

    # ---- static tiling geometry (sweep l_tile 256-1024 per chip) ---------------
    halo = max((k - 1) * dilation - stride + 1, 1)
    halo_blk = _round_up(halo, 128)
    l_tile = max(int(l_tile), 128)
    l_tile = min(l_tile, _round_up(l_out, 128))
    l_tile = _round_up(l_tile, halo_blk)            # keeps the halo block index integral
    num_t = pl.cdiv(l_out, l_tile)
    lb_in = l_tile * stride                         # input lanes consumed per tile (x128)
    c_in_p = _round_up(c_in, 8)                     # sublane-align channels once
    l_out_pad = num_t * l_tile
    l_x = max(num_t * lb_in + halo_blk, l + 2 * padding)

    # One fused pad: conv zero-padding (left), tile+halo padding (right), channel pad.
    # No NCL<->NLC transposes anywhere.
    x_p = jnp.pad(x, ((0, 0), (0, c_in_p - c_in), (padding, l_x - l - padding)))

    # Fold the K taps into a single (C_out, K*C_in_p) matmul operand.
    w_p = jnp.pad(weight, ((0, 0), (0, c_in_p - c_in), (0, 0)))
    w2 = jnp.transpose(w_p, (0, 2, 1)).reshape(c_out, k * c_in_p).astype(x.dtype)

    # ---- shared BlockSpecs ------------------------------------------------------
    ratio = lb_in // halo_blk
    x_spec = pl.BlockSpec((1, c_in_p, lb_in), lambda ni, j: (ni, 0, j))
    xh_spec = pl.BlockSpec((1, c_in_p, halo_blk), lambda ni, j: (ni, 0, (j + 1) * ratio))
    w_spec = pl.BlockSpec((c_out, k * c_in_p), lambda ni, j: (0, 0))
    vec_spec = pl.BlockSpec((c_out, 1), lambda ni, j: (0, 0))

    vmem_bytes = _vmem_estimate(c_in_p, c_out, k * c_in_p, l_tile, lb_in, halo_blk, x.dtype)

    # ---- pass 1: conv -> per-channel sum / sum-of-squares ----------------------
    sum_out, sq_out = pl.pallas_call(
        functools.partial(_stats_kernel, ksize=k, stride=stride, dilation=dilation,
                          l_tile=l_tile, l_out=l_out),
        grid=(n, num_t),
        in_specs=[x_spec, xh_spec, w_spec],
        out_specs=[pl.BlockSpec((c_out, 1), lambda ni, j: (0, 0)),
                   pl.BlockSpec((c_out, 1), lambda ni, j: (0, 0))],
        out_shape=[jax.ShapeDtypeStruct((c_out, 1), jnp.float32),
                   jax.ShapeDtypeStruct((c_out, 1), jnp.float32)],
        compiler_params=pltpu.CompilerParams(
            dimension_semantics=("arbitrary", "arbitrary"),   # global accumulator outputs
            vmem_limit_bytes=vmem_bytes),
    )(x_p, x_p, w2)

    # ---- tiny XLA glue: finalize BN stats, fold everything into scale/shift -----
    count = jnp.float32(n * l_out)
    mean_c = sum_out / count                                    # mean of conv (no bias)
    var = jnp.maximum(sq_out / count - mean_c * mean_c, 0.0)    # biased variance
    inv = lax.rsqrt(var + eps)
    scale = gamma.reshape(c_out, 1).astype(jnp.float32) * inv
    shift = beta.reshape(c_out, 1).astype(jnp.float32) - mean_c * scale

    # ---- pass 2: recompute conv per tile, normalize, lane-dense store -----------
    out_full = pl.pallas_call(
        functools.partial(_apply_kernel, ksize=k, stride=stride, dilation=dilation,
                          l_tile=l_tile),
        grid=(n, num_t),
        in_specs=[x_spec, xh_spec, w_spec, vec_spec, vec_spec],
        out_specs=pl.BlockSpec((1, c_out, l_tile), lambda ni, j: (ni, 0, j)),
        out_shape=jax.ShapeDtypeStruct((n, c_out, l_out_pad), x.dtype),
        compiler_params=pltpu.CompilerParams(
            dimension_semantics=("parallel", "parallel"),       # megacore-shardable on v7x
            vmem_limit_bytes=vmem_bytes),
    )(x_p, x_p, w2, scale, shift)

    if l_out_pad != l_out:
        out_full = out_full[:, :, :l_out]
    return out_full


def _reference(x, weight, bias, gamma, beta, *, stride, padding, dilation, eps):
    y = lax.conv_general_dilated(
        x, weight, window_strides=(stride,), padding=[(padding, padding)],
        rhs_dilation=(dilation,), dimension_numbers=('NCH', 'OIH', 'NCH'))
    y = y + bias[None, :, None]
    mean = jnp.mean(y, axis=(0, 2), keepdims=True)
    var = jnp.mean((y - mean) ** 2, axis=(0, 2), keepdims=True)
    return (y - mean) / jnp.sqrt(var + eps) * gamma[None, :, None] + beta[None, :, None]


if __name__ == "__main__":
    # Small shapes consistent with Conv1d/BatchNorm1d: N=2, C_in=4, L=16,
    # C_out=8, kernel_size=3, stride=1, padding=1, dilation=1.
    N, C_IN, L = 2, 4, 16
    C_OUT, K = 8, 3
    STRIDE, PAD, DIL, EPS = 1, 1, 1, 1e-5

    key = jax.random.PRNGKey(0)
    kx, kw, kb, kg, kbe = jax.random.split(key, 5)
    x = jax.random.normal(kx, (N, C_IN, L), dtype=jnp.float32)
    weight = jax.random.normal(kw, (C_OUT, C_IN, K), dtype=jnp.float32) * 0.1
    bias = jax.random.normal(kb, (C_OUT,), dtype=jnp.float32) * 0.1
    gamma = 1.0 + 0.1 * jax.random.normal(kg, (C_OUT,), dtype=jnp.float32)
    beta = 0.1 * jax.random.normal(kbe, (C_OUT,), dtype=jnp.float32)

    out = conv_norm_1d(x, weight, bias, gamma, beta,
                       stride=STRIDE, padding=PAD, dilation=DIL, eps=EPS)
    out = jax.block_until_ready(out)

    ref = _reference(x, weight, bias, gamma, beta,
                     stride=STRIDE, padding=PAD, dilation=DIL, eps=EPS)
    assert out.shape == ref.shape, (out.shape, ref.shape)
    assert jnp.allclose(out, ref, atol=1e-4, rtol=1e-4), "mismatch vs reference"

    print("KERNEL_OK")
</pallas_src>

<mosaic_0001>
module attributes {stable_mosaic.version = 11 : i64} {
  func.func @_stats_kernel(%arg0: i32, %arg1: i32, %arg2: memref<1x8x128xf32, #tpu.memory_space<vmem>>, %arg3: memref<1x8x128xf32, #tpu.memory_space<vmem>>, %arg4: memref<8x24xf32, #tpu.memory_space<vmem>>, %arg5: memref<8x1xf32, #tpu.memory_space<vmem>>, %arg6: memref<8x1xf32, #tpu.memory_space<vmem>>) attributes {dimension_semantics = [#tpu.dimension_semantics<arbitrary>, #tpu.dimension_semantics<arbitrary>], iteration_bounds = array<i64: 2, 1>, scalar_prefetch = 0 : i64, scratch_operands = 0 : i64, tpu.core_type = #tpu.core_type<tc>, window_params = [{transform_indices = @transform_0, window_bounds = array<i64: 1, 8, 128>}, {transform_indices = @transform_1, window_bounds = array<i64: 1, 8, 128>}, {pipeline_mode = #tpu.pipeline_mode<synchronous>, transform_indices = @transform_2, window_bounds = array<i64: 8, 24>}, {pipeline_mode = #tpu.pipeline_mode<synchronous>, transform_indices = @transform_3, window_bounds = array<i64: 8, 1>}, {pipeline_mode = #tpu.pipeline_mode<synchronous>, transform_indices = @transform_4, window_bounds = array<i64: 8, 1>}]} {
    %c0_i32 = arith.constant 0 : i32
    %0 = arith.cmpi eq, %arg0, %c0_i32 : i32
    %c0_i32_0 = arith.constant 0 : i32
    %1 = arith.cmpi eq, %arg1, %c0_i32_0 : i32
    %2 = arith.andi %0, %1 : i1
    %3 = arith.extui %2 : i1 to i32
    %c0_i32_1 = arith.constant 0 : i32
    %4 = arith.cmpi ne, %3, %c0_i32_1 : i32
    scf.if %4 {
      %cst_20 = arith.constant 0.000000e+00 : f32
      %36 = vector.broadcast %cst_20 : f32 to vector<8x1xf32>
      %c0_21 = arith.constant 0 : index
      %c0_22 = arith.constant 0 : index
      %37 = vector.load %arg5[%c0_21, %c0_22] : memref<8x1xf32, #tpu.memory_space<vmem>>, vector<8x1xf32>
      tpu.vector_store %arg5[%c0_21, %c0_22], %36 {strides = array<i32>} : memref<8x1xf32, #tpu.memory_space<vmem>>, vector<8x1xf32>,
      %cst_23 = arith.constant 0.000000e+00 : f32
      %38 = vector.broadcast %cst_23 : f32 to vector<8x1xf32>
      %c0_24 = arith.constant 0 : index
      %c0_25 = arith.constant 0 : index
      %39 = vector.load %arg6[%c0_24, %c0_25] : memref<8x1xf32, #tpu.memory_space<vmem>>, vector<8x1xf32>
      tpu.vector_store %arg6[%c0_24, %c0_25], %38 {strides = array<i32>} : memref<8x1xf32, #tpu.memory_space<vmem>>, vector<8x1xf32>,
    } else {
    }
    %c0 = arith.constant 0 : index
    %c0_2 = arith.constant 0 : index
    %c0_3 = arith.constant 0 : index
    %5 = vector.load %arg2[%c0, %c0_2, %c0_3] : memref<1x8x128xf32, #tpu.memory_space<vmem>>, vector<1x8x128xf32>
    %6 = vector.shape_cast %5 : vector<1x8x128xf32> to vector<8x128xf32>
    %c0_4 = arith.constant 0 : index
    %c0_5 = arith.constant 0 : index
    %c0_6 = arith.constant 0 : index
    %7 = vector.load %arg3[%c0_4, %c0_5, %c0_6] : memref<1x8x128xf32, #tpu.memory_space<vmem>>, vector<1x8x128xf32>
    %8 = vector.shape_cast %7 : vector<1x8x128xf32> to vector<8x128xf32>
    %9 = tpu.concatenate %6, %8 in 1 : vector<8x128xf32>, vector<8x128xf32> -> vector<8x256xf32>
    %10 = vector.extract_strided_slice %9 {offsets = [0, 0], sizes = [8, 128], strides = [1, 1]} : vector<8x256xf32> to vector<8x128xf32>
    %11 = vector.extract_strided_slice %9 {offsets = [0, 1], sizes = [8, 128], strides = [1, 1]} : vector<8x256xf32> to vector<8x128xf32>
    %12 = vector.extract_strided_slice %9 {offsets = [0, 2], sizes = [8, 128], strides = [1, 1]} : vector<8x256xf32> to vector<8x128xf32>
    %13 = tpu.concatenate %10, %11, %12 in 0 : vector<8x128xf32>, vector<8x128xf32>, vector<8x128xf32> -> vector<24x128xf32>
    %c0_7 = arith.constant 0 : index
    %c0_8 = arith.constant 0 : index
    %14 = vector.load %arg4[%c0_7, %c0_8] : memref<8x24xf32, #tpu.memory_space<vmem>>, vector<8x24xf32>
    %cst = arith.constant dense<0.000000e+00> : vector<8x128xf32>
    %15 = tpu.matmul %14, %13, %cst {dimension_numbers = #tpu.dot_dimension_numbers<[1], [0], [0], [1], [0, 0, 1, 1], [], []>} : vector<8x24xf32>, vector<24x128xf32>, vector<8x128xf32> -> vector<8x128xf32>
    %16 = tpu.iota {dimensions = array<i32: 1>} : vector<1x128xi32>
    %c128_i32 = arith.constant 128 : i32
    %17 = arith.muli %arg1, %c128_i32 : i32
    %c16_i32 = arith.constant 16 : i32
    %18 = arith.subi %c16_i32, %17 : i32
    %19 = vector.broadcast %18 : i32 to vector<1x128xi32>
    %20 = arith.cmpi slt, %16, %19 : vector<1x128xi32>
    %cst_9 = arith.constant 0.000000e+00 : f32
    %21 = vector.shape_cast %20 : vector<1x128xi1> to vector<1x128xi1>
    %22 = vector.broadcast %21 : vector<1x128xi1> to vector<8x128xi1>
    %23 = vector.broadcast %cst_9 : f32 to vector<8x128xf32>
    %24 = arith.select %22, %15, %23 : vector<8x128xi1>, vector<8x128xf32>
    %c0_10 = arith.constant 0 : index
    %c0_11 = arith.constant 0 : index
    %25 = vector.load %arg5[%c0_10, %c0_11] : memref<8x1xf32, #tpu.memory_space<vmem>>, vector<8x1xf32>
    %cst_12 = arith.constant dense<0.000000e+00> : vector<8xf32>
    %26 = vector.multi_reduction <add>, %24, %cst_12 [1] : vector<8x128xf32> to vector<8xf32>
    %27 = vector.shape_cast %26 : vector<8xf32> to vector<8x1xf32>
    %28 = arith.addf %25, %27 : vector<8x1xf32>
    %c0_13 = arith.constant 0 : index
    %c0_14 = arith.constant 0 : index
    %29 = vector.load %arg5[%c0_13, %c0_14] : memref<8x1xf32, #tpu.memory_space<vmem>>, vector<8x1xf32>
    tpu.vector_store %arg5[%c0_13, %c0_14], %28 {strides = array<i32>} : memref<8x1xf32, #tpu.memory_space<vmem>>, vector<8x1xf32>,
    %c0_15 = arith.constant 0 : index
    %c0_16 = arith.constant 0 : index
    %30 = vector.load %arg6[%c0_15, %c0_16] : memref<8x1xf32, #tpu.memory_space<vmem>>, vector<8x1xf32>
    %31 = arith.mulf %24, %24 : vector<8x128xf32>
    %cst_17 = arith.constant dense<0.000000e+00> : vector<8xf32>
    %32 = vector.multi_reduction <add>, %31, %cst_17 [1] : vector<8x128xf32> to vector<8xf32>
    %33 = vector.shape_cast %32 : vector<8xf32> to vector<8x1xf32>
    %34 = arith.addf %30, %33 : vector<8x1xf32>
    %c0_18 = arith.constant 0 : index
    %c0_19 = arith.constant 0 : index
    %35 = vector.load %arg6[%c0_18, %c0_19] : memref<8x1xf32, #tpu.memory_space<vmem>>, vector<8x1xf32>
    tpu.vector_store %arg6[%c0_18, %c0_19], %34 {strides = array<i32>} : memref<8x1xf32, #tpu.memory_space<vmem>>, vector<8x1xf32>,
    return
  }
  func.func @transform_0(%arg0: i32, %arg1: i32) -> (i32, i32, i32) {
    %c0_i32 = arith.constant 0 : i32
    %c0_i32_0 = arith.constant 0 : i32
    return %arg0, %c0_i32, %arg1 : i32, i32, i32
  }
  func.func @transform_1(%arg0: i32, %arg1: i32) -> (i32, i32, i32) {
    %c1_i32 = arith.constant 1 : i32
    %0 = arith.addi %arg1, %c1_i32 : i32
    %c1_i32_0 = arith.constant 1 : i32
    %1 = arith.muli %0, %c1_i32_0 : i32
    %c0_i32 = arith.constant 0 : i32
    %c0_i32_1 = arith.constant 0 : i32
    return %arg0, %c0_i32, %1 : i32, i32, i32
  }
  func.func @transform_2(%arg0: i32, %arg1: i32) -> (i32, i32) {
    %c0_i32 = arith.constant 0 : i32
    %c0_i32_0 = arith.constant 0 : i32
    %c0_i32_1 = arith.constant 0 : i32
    return %c0_i32, %c0_i32_0 : i32, i32
  }
  func.func @transform_3(%arg0: i32, %arg1: i32) -> (i32, i32) {
    %c0_i32 = arith.constant 0 : i32
    %c0_i32_0 = arith.constant 0 : i32
    %c0_i32_1 = arith.constant 0 : i32
    return %c0_i32, %c0_i32_0 : i32, i32
  }
  func.func @transform_4(%arg0: i32, %arg1: i32) -> (i32, i32) {
    %c0_i32 = arith.constant 0 : i32
    %c0_i32_0 = arith.constant 0 : i32
    %c0_i32_1 = arith.constant 0 : i32
    return %c0_i32, %c0_i32_0 : i32, i32
  }
}

</mosaic_0001>

<llo_original>
// kernel: tpu_custom_call.1
$region0: #{tpu_custom_call.1}
  #allocation0 [shape = 'u32[]', space=smem, size = 0x4, offset = 0x4, fixed_abs, tag = 'smem constant byte address 0x4 - core index']
  #allocation1 [shape = 'u32[144,128]{1,0:T(1,128)}', space=vmem, size = 0x12000, scoped, tag = 'internal scratch']
  %s0 = inlined_call_operand.hbm [shape: f32[2,8,256], index: 0, kind: input, shape index: {}]
  %s1 = inlined_call_operand.hbm [shape: f32[2,8,256], index: 1, kind: input, shape index: {}]
  %s2 = inlined_call_operand.hbm [shape: f32[8,24], index: 2, kind: input, shape index: {}]
  %s3 = inlined_call_operand.vmem [shape: f32[8,1], index: 3, kind: output, shape index: {0}]
  %s4 = inlined_call_operand.vmem [shape: f32[8,1], index: 4, kind: output, shape index: {1}]
  %5 = xla_tuple %s3, %s4
  %s6 = sld [smem:[#allocation0]]
  $region69: #{tpu_custom_call.1} parent=0
    _
  %s8 = ssub.s32 1, %s6
  %s9 = scalar_select 0, %s8, %s6
  $region1: #{tpu_custom_call.1} parent=0
    #allocation2 [shape = 'u8[8192]{0}', space=vmem, size = 0x2000, scoped, tag = 'input window, operand 0']
    #allocation3 [shape = 's32[2]{0}', space=sflag, size = 0x8, scoped, tag = 'scoped memory for tpu_custom_call.1']
    #allocation4 [shape = 'u8[8192]{0}', space=vmem, size = 0x2000, scoped, tag = 'input window, operand 1']
    #allocation5 [shape = 's32[2]{0}', space=sflag, size = 0x8, scoped, tag = 'scoped memory for tpu_custom_call.1']
    #allocation6 [shape = 'u8[4096]{0}', space=vmem, size = 0x1000, scoped, tag = 'input window, operand 2, single buffered']
    %10 = vsyncpa [#allocation3], 0
    %s11 = scalar_lea.sflag [#allocation3], 1
    %12 = vsyncpa %s11, 0
    %13 = vsyncpa [#allocation5], 0
    %s14 = scalar_lea.sflag [#allocation5], 1
    %15 = vsyncpa %s14, 0
    loop: start=0, step=1, limit=4
    $region2: #{tpu_custom_call.1} parent=1 // loop_pre_header
      _
    $region3: #{tpu_custom_call.1} parent=1 // loop_header
      %s17 = sphi 0, %s21
      %p18 = scmp.ge.s32.totalorder %s17, 4
      %s24 = sphi 0, %s36
      %s25 = sphi 0, %s32
      %s26 = sphi 0, %s24
      %s27 = sphi 0, %s25
      %s28 = sphi 0, %s26
      %s29 = sphi 0, %s27
      %s41 = sphi 0, %s43
      %s44 = sphi 0, %s41
      %s45 = sphi 0, %s44
      %s61 = sphi 0, %s45
      %s71 = sphi 0, %s73
      %s74 = sphi 0, %s71
      %s75 = sphi 0, %s74
      %s91 = sphi 0, %s75
      %s95 = sphi 0, %s95
      %s97 = sphi 0, %s95
      %s98 = sphi 0, %s97
      %s112 = sphi 0, %s98
      %s116 = sphi 0, %s116
      %s118 = sphi 0, %s116
      %s119 = sphi 0, %s118
      %s133 = sphi 0, %s119
      %s137 = sphi 0, %s137
      %s139 = sphi 0, %s137
      %s140 = sphi 0, %s139
      %s154 = sphi 0, %s140
    $region4: #{tpu_custom_call.1} parent=1 // loop_header_branch
      %20 = sbr.rel (%p18) target = $region8
    $region5: #{tpu_custom_call.1} parent=1 // loop_body
      %s22 = ssub.s32 %s17, 1
      %s23 = ssub.s32 %s17, 2
      %s30 = sadd.s32 1, %s25
      %p31 = scmp.ge.s32.totalorder %s30, 1
      %s32 = scalar_select %p31, 0, %s30
      %s33 = sadd.s32 1, %s24
      %s34 = scalar_select %p31, %s33, %s24
      %p35 = scmp.ge.s32.totalorder %s34, 2
      %s36 = scalar_select %p35, 0, %s34
      %s37 = ssub.s32 %s24, %s36
      %s38 = ssub.s32 %s25, %s32
      %s39 = sor.u32 %s37, %s38
      %p40 = scmp.eq.s32.totalorder %s39, 0
      %s42 = sadd.s32 %s41, 1
      %s43 = scalar_select %p40, %s41, %s42
      %p46 = pneg %p40
      %p47 = scmp.eq.s32.totalorder %s17, 1
      %p48 = por %p46, %p47
      %p49 = scmp.ne.s32.totalorder %s41, %s44
      %p50 = scmp.eq.s32.totalorder %s17, 0
      %p51 = por %p49, %p50
      %p52 = scmp.ne.s32.totalorder %s41, %s44
      %p53 = scmp.eq.s32.totalorder %s22, 1
      %p54 = por %p52, %p53
      %p55 = scmp.ne.s32.totalorder %s44, %s45
      %p56 = scmp.eq.s32.totalorder %s22, 0
      %p57 = por %p55, %p56
      %p58 = scmp.ne.s32.totalorder %s44, %s45
      %p59 = scmp.eq.s32.totalorder %s23, 1
      %p60 = por %p58, %p59
      %p62 = scmp.ne.s32.totalorder %s45, %s61
      %p63 = scmp.eq.s32.totalorder %s23, 0
      %p64 = por %p62, %p63
      %s65 = sadd.s32 %s25, 1
      %s66 = sadd.s32 %s32, 1
      %s67 = ssub.s32 %s24, %s36
      %s68 = ssub.s32 %s65, %s66
      %s69 = sor.u32 %s67, %s68
      %p70 = scmp.eq.s32.totalorder %s69, 0
      %s72 = sadd.s32 %s71, 1
      %s73 = scalar_select %p70, %s71, %s72
      %p76 = pneg %p70
      %p77 = scmp.eq.s32.totalorder %s17, 1
      %p78 = por %p76, %p77
      %p79 = scmp.ne.s32.totalorder %s71, %s74
      %p80 = scmp.eq.s32.totalorder %s17, 0
      %p81 = por %p79, %p80
      %p82 = scmp.ne.s32.totalorder %s71, %s74
      %p83 = scmp.eq.s32.totalorder %s22, 1
      %p84 = por %p82, %p83
      %p85 = scmp.ne.s32.totalorder %s74, %s75
      %p86 = scmp.eq.s32.totalorder %s22, 0
      %p87 = por %p85, %p86
      %p88 = scmp.ne.s32.totalorder %s74, %s75
      %p89 = scmp.eq.s32.totalorder %s23, 1
      %p90 = por %p88, %p89
      %p92 = scmp.ne.s32.totalorder %s75, %s91
      %p93 = scmp.eq.s32.totalorder %s23, 0
      %p94 = por %p92, %p93
      %s96 = sadd.s32 %s95, 1
      %p99 = scmp.eq.s32.totalorder %s17, 1
      %p100 = scmp.ne.s32.totalorder %s95, %s97
      %p101 = scmp.eq.s32.totalorder %s17, 0
      %p102 = por %p100, %p101
      %p103 = scmp.ne.s32.totalorder %s95, %s97
      %p104 = scmp.eq.s32.totalorder %s22, 1
      %p105 = por %p103, %p104
      %p106 = scmp.ne.s32.totalorder %s97, %s98
      %p107 = scmp.eq.s32.totalorder %s22, 0
      %p108 = por %p106, %p107
      %p109 = scmp.ne.s32.totalorder %s97, %s98
      %p110 = scmp.eq.s32.totalorder %s23, 1
      %p111 = por %p109, %p110
      %p113 = scmp.ne.s32.totalorder %s98, %s112
      %p114 = scmp.eq.s32.totalorder %s23, 0
      %p115 = por %p113, %p114
      %s117 = sadd.s32 %s116, 1
      %p120 = scmp.eq.s32.totalorder %s17, 1
      %p121 = scmp.ne.s32.totalorder %s116, %s118
      %p122 = scmp.eq.s32.totalorder %s17, 0
      %p123 = por %p121, %p122
      %p124 = scmp.ne.s32.totalorder %s116, %s118
      %p125 = scmp.eq.s32.totalorder %s22, 1
      %p126 = por %p124, %p125
      %p127 = scmp.ne.s32.totalorder %s118, %s119
      %p128 = scmp.eq.s32.totalorder %s22, 0
      %p129 = por %p127, %p128
      %p130 = scmp.ne.s32.totalorder %s118, %s119
      %p131 = scmp.eq.s32.totalorder %s23, 1
      %p132 = por %p130, %p131
      %p134 = scmp.ne.s32.totalorder %s119, %s133
      %p135 = scmp.eq.s32.totalorder %s23, 0
      %p136 = por %p134, %p135
      %s138 = sadd.s32 %s137, 1
      %p141 = scmp.eq.s32.totalorder %s17, 1
      %p142 = scmp.ne.s32.totalorder %s137, %s139
      %p143 = scmp.eq.s32.totalorder %s17, 0
      %p144 = por %p142, %p143
      %p145 = scmp.ne.s32.totalorder %s137, %s139
      %p146 = scmp.eq.s32.totalorder %s22, 1
      %p147 = por %p145, %p146
      %p148 = scmp.ne.s32.totalorder %s139, %s140
      %p149 = scmp.eq.s32.totalorder %s22, 0
      %p150 = por %p148, %p149
      %p151 = scmp.ne.s32.totalorder %s139, %s140
      %p152 = scmp.eq.s32.totalorder %s23, 1
      %p153 = por %p151, %p152
      %p155 = scmp.ne.s32.totalorder %s140, %s154
      %p156 = scmp.eq.s32.totalorder %s23, 0
      %p157 = por %p155, %p156
      %p158 = scmp.le.s32.totalorder 1, %s17
      %p159 = scmp.lt.s32.totalorder %s17, 3
      %p160 = pnand %p158, %p159
      %p161 = pneg %p160
      // Predicated region
      $region9: #{tpu_custom_call.1} parent=5 // pred_check
        _
      $region10: #{tpu_custom_call.1} parent=5 // pred_check_branch
        %163 = sbr.rel (%p160) target = $region12
      $region11: #{tpu_custom_call.1} parent=5 // pred_region
        %s164 = ssub.s32 %s17, 1
        // Predicated region
        $region13: #{tpu_custom_call.1} parent=11 // pred_check
          %p165 = pneg %p108
        $region14: #{tpu_custom_call.1} parent=11 // pred_check_branch
          %167 = sbr.rel (%p165) target = $region16
        $region15: #{tpu_custom_call.1} parent=11 // pred_region
          %s169 = ssub.s32 128, 128
          %170 = vsyncadd [#allocation5], %s169
          %s172 = sshll.u32 [#allocation6], 4
          %s173 = int_to_ptr.vmem [resolvable:$true] %s172
          %175 = dma.hbm_to_vmem [thread:$0]  %s2, 128, %s173, [#allocation5]
        $region16: #{tpu_custom_call.1} parent=11 // pred_fallthru
          _
      $region12: #{tpu_custom_call.1} parent=5 // pred_fallthru
        _
      %p176 = scmp.lt.s32.totalorder %s17, 2
      // Predicated region
      $region17: #{tpu_custom_call.1} parent=5 // pred_check
        %p177 = pneg %p176
      $region18: #{tpu_custom_call.1} parent=5 // pred_check_branch
        %179 = sbr.rel (%p177) target = $region20
      $region19: #{tpu_custom_call.1} parent=5 // pred_region
        // Predicated region
        $region21: #{tpu_custom_call.1} parent=19 // pred_check
          %p180 = pneg %p51
        $region22: #{tpu_custom_call.1} parent=19 // pred_check_branch
          %182 = sbr.rel (%p180) target = $region24
        $region23: #{tpu_custom_call.1} parent=19 // pred_region
          %s183 = sand.u32 %s41, 1
          %s184 = scalar_lea.sflag [#allocation3], %s183
          %s185 = sand.u32 %s41, 1
          %s186 = smul.addr %s185, 8
          %s187 = scalar_lea.vmem [#allocation2], %s186
          %s189 = ssub.s32 128, 128
          %190 = vsyncadd %s184, %s189
          %s191 = smul.addr %s24, 2
          %s192 = sadd.s32 %s25, %s191
          %s193 = smul.addr %s192, 128
          %s194 = scalar_lea.hbm %s0, %s193
          %s196 = sshll.u32 %s187, 4
          %s197 = int_to_ptr.vmem [resolvable:$true] %s196
          %199 = dma.hbm_to_vmem [thread:$0]  %s194, 128, %s197, %s184
        $region24: #{tpu_custom_call.1} parent=19 // pred_fallthru
          _
        // Predicated region
        $region25: #{tpu_custom_call.1} parent=19 // pred_check
          %p200 = pneg %p81
        $region26: #{tpu_custom_call.1} parent=19 // pred_check_branch
          %202 = sbr.rel (%p200) target = $region28
        $region27: #{tpu_custom_call.1} parent=19 // pred_region
          %s203 = sand.u32 %s17, 1
          %s204 = scalar_lea.sflag [#allocation5], %s203
          %s205 = sand.u32 %s71, 1
          %s206 = smul.addr %s205, 8
          %s207 = scalar_lea.vmem [#allocation4], %s206
          %s208 = sadd.s32 %s25, 1
          %s210 = ssub.s32 128, 128
          %211 = vsyncadd %s204, %s210
          %s212 = smul.addr %s24, 2
          %s213 = sadd.s32 %s208, %s212
          %s214 = smul.addr %s213, 128
          %s215 = scalar_lea.hbm %s1, %s214
          %s217 = sshll.u32 %s207, 4
          %s218 = int_to_ptr.vmem [resolvable:$true] %s217
          %220 = dma.hbm_to_vmem [thread:$0]  %s215, 128, %s218, %s204
        $region28: #{tpu_custom_call.1} parent=19 // pred_fallthru
          _
      $region20: #{tpu_custom_call.1} parent=5 // pred_fallthru
        _
      %p221 = scmp.le.s32.totalorder 1, %s17
      %p222 = scmp.lt.s32.totalorder %s17, 3
      %p223 = pnand %p221, %p222
      %p224 = pneg %p223
      // Predicated region
      $region29: #{tpu_custom_call.1} parent=5 // pred_check
        _
      $region30: #{tpu_custom_call.1} parent=5 // pred_check_branch
        %226 = sbr.rel (%p223) target = $region32
      $region31: #{tpu_custom_call.1} parent=5 // pred_region
        %s227 = ssub.s32 %s17, 1
        %s228 = sand.u32 %s44, 1
        %s229 = scalar_lea.sflag [#allocation3], %s228
        %s230 = sand.u32 %s44, 1
        %s231 = smul.addr %s230, 8
        %s232 = scalar_lea.vmem [#allocation2], %s231
        // Predicated region
        $region33: #{tpu_custom_call.1} parent=31 // pred_check
          %p233 = pneg %p57
        $region34: #{tpu_custom_call.1} parent=31 // pred_check_branch
          %235 = sbr.rel (%p233) target = $region36
        $region35: #{tpu_custom_call.1} parent=31 // pred_region
          %236 = dma.done %s229, 128
        $region36: #{tpu_custom_call.1} parent=31 // pred_fallthru
          _
        %s237 = sand.u32 %s22, 1
        %s238 = scalar_lea.sflag [#allocation5], %s237
        %s239 = sand.u32 %s74, 1
        %s240 = smul.addr %s239, 8
        %s241 = scalar_lea.vmem [#allocation4], %s240
        // Predicated region
        $region37: #{tpu_custom_call.1} parent=31 // pred_check
          %p242 = pneg %p87
        $region38: #{tpu_custom_call.1} parent=31 // pred_check_branch
          %244 = sbr.rel (%p242) target = $region40
        $region39: #{tpu_custom_call.1} parent=31 // pred_region
          %245 = dma.done %s238, 128
        $region40: #{tpu_custom_call.1} parent=31 // pred_fallthru
          _
        // Predicated region
        $region41: #{tpu_custom_call.1} parent=31 // pred_check
          %p246 = pneg %p108
        $region42: #{tpu_custom_call.1} parent=31 // pred_check_branch
          %248 = sbr.rel (%p246) target = $region44
        $region43: #{tpu_custom_call.1} parent=31 // pred_region
          %249 = dma.done [#allocation5], 128
        $region44: #{tpu_custom_call.1} parent=31 // pred_fallthru
          _
        %s250 = sand.u32 %s44, 1
        %s251 = scalar_lea.sflag [#allocation3], %s250
        %s252 = sand.u32 %s44, 1
        %s253 = smul.addr %s252, 8
        %s254 = scalar_lea.vmem [#allocation2], %s253
        %p255 = pneg %p57
        %p256 = pneg %p54
        %s257 = sand.u32 %s22, 1
        %s258 = scalar_lea.sflag [#allocation5], %s257
        %s259 = sand.u32 %s74, 1
        %s260 = smul.addr %s259, 8
        %s261 = scalar_lea.vmem [#allocation4], %s260
        %p262 = pneg %p87
        %p263 = pneg %p84
        %p264 = pneg %p108
        %p265 = pneg %p105
        %p266 = pneg %p129
        %p267 = pneg %p126
        %p268 = pneg %p150
        %p269 = pneg %p147
        %s270 = sadd.s32 %s27, 1
        %p271 = scmp.eq.s32.totalorder %s26, 0
        %p272 = scmp.eq.s32.totalorder %s27, 0
        %p273 = pnand %p271, %p272
        %p274 = pneg %p273
        // Predicated region
        $region45: #{tpu_custom_call.1} parent=31 // pred_check
          _
        $region46: #{tpu_custom_call.1} parent=31 // pred_check_branch
          %276 = sbr.rel (%p273) target = $region48
        $region47: #{tpu_custom_call.1} parent=31 // pred_region
          %vm277 = vcmask 7168
          %278 = vst.msk [vmem:[%s3] sm:$0xff] %vm277, 0.0
          %279 = vst.msk [vmem:[%s4] sm:$0xff] %vm277, 0.0
        $region48: #{tpu_custom_call.1} parent=31 // pred_fallthru
          _
        %v280 = vld [vmem:[%s232] sm:$0xff]
        %v281 = vld [vmem:[%s241] sm:$0xff]
        %284 = vrot.lane.b32.xlu0 %v280, 127
        %v285 = vpop.permute.xlu0 %284
        %286 = vrot.lane.b32.xlu0 %v281, 127
        %v287 = vpop.permute.xlu0 %286
        %vm288 = vcmask 1039360
        %v289 = vsel %vm288, %v285, %v287
        %291 = vrot.lane.b32.xlu0 %v280, 126
        %v292 = vpop.permute.xlu0 %291
        %293 = vrot.lane.b32.xlu0 %v281, 126
        %v294 = vpop.permute.xlu0 %293
        %vm295 = vcmask 1031168
        %v296 = vsel %vm295, %v292, %v294
        %v298 = vld [vmem:[#allocation6] sm:$0xff]
        %vm299 = vcmask 195584
        %v301 = vsel %vm299, %v298, 0
        %303 = vmatprep.subr.mxu0 0.0
        %304 = vmatpush1.msra.mxu0 0.0
        %305 = vmatprep.subr.mxu0 0.0
        %306 = vmatpush1.msra.mxu0 0.0
        %307 = vmatprep.subr.mxu0 0.0
        %308 = vmatpush1.msra.mxu0 0.0
        %309 = vmatprep.subr.mxu0 0.0
        %310 = vmatpush1.msra.mxu0 0.0
        %311 = vmatprep.subr.mxu0 0.0
        %312 = vmatpush1.msra.mxu0 0.0
        %313 = vmatprep.subr.mxu0 0.0
        %314 = vmatpush1.msra.mxu0 0.0
        %315 = vmatprep.subr.mxu0 0.0
        %316 = vmatpush1.msra.mxu0 0.0
        %317 = vmatprep.subr.mxu0 0.0
        %318 = vmatpush1.msra.mxu0 0.0
        %319 = vmatprep.subr.mxu0 0.0
        %320 = vmatpush1.msra.mxu0 0.0
        %321 = vmatprep.subr.mxu0 0.0
        %322 = vmatpush1.msra.mxu0 0.0
        %323 = vmatprep.subr.mxu0 0.0
        %324 = vmatpush1.msra.mxu0 0.0
        %325 = vmatprep.subr.mxu0 0.0
        %326 = vmatpush1.msra.mxu0 0.0
        %327 = vmatprep.subr.mxu0 0.0
        %328 = vmatpush1.msra.mxu0 0.0
        %329 = vmatprep.subr.mxu0 0.0
        %330 = vmatpush1.msra.mxu0 %v296
        %331 = vmatprep.subr.mxu0 0.0
        %332 = vmatpush1.msra.mxu0 %v289
        %333 = vmatprep.subr.mxu0 0.0
        %334 = vmatpush1.msra.mxu0 %v280
        %335 = vmatprep.subr.mxu0 0.0
        %336 = vmatpush2.msra.mxu0 0.0
        %337 = vmatprep.subr.mxu0 0.0
        %338 = vmatpush2.msra.mxu0 0.0
        %339 = vmatprep.subr.mxu0 0.0
        %340 = vmatpush2.msra.mxu0 0.0
        %341 = vmatprep.subr.mxu0 0.0
        %342 = vmatpush2.msra.mxu0 0.0
        %343 = vmatprep.subr.mxu0 0.0
        %344 = vmatpush2.msra.mxu0 0.0
        %345 = vmatprep.subr.mxu0 0.0
        %346 = vmatpush2.msra.mxu0 0.0
        %347 = vmatprep.subr.mxu0 0.0
        %348 = vmatpush2.msra.mxu0 0.0
        %349 = vmatprep.subr.mxu0 0.0
        %350 = vmatpush2.msra.mxu0 0.0
        %351 = vmatprep.subr.mxu0 0.0
        %352 = vmatpush2.msra.mxu0 0.0
        %353 = vmatprep.subr.mxu0 0.0
        %354 = vmatpush2.msra.mxu0 0.0
        %355 = vmatprep.subr.mxu0 0.0
        %356 = vmatpush2.msra.mxu0 0.0
        %357 = vmatprep.subr.mxu0 0.0
        %358 = vmatpush2.msra.mxu0 0.0
        %359 = vmatprep.subr.mxu0 0.0
        %360 = vmatpush2.msra.mxu0 0.0
        %361 = vmatprep.subr.mxu0 0.0
        %362 = vmatpush2.msra.mxu0 0.0
        %363 = vmatprep.subr.mxu0 0.0
        %364 = vmatpush2.msra.mxu0 0.0
        %365 = vmatprep.subr.mxu0 0.0
        %366 = vmatpush2.msra.mxu0 0.0
        %367 = vmatprep.mubr.f32.mxu0 0.0
        %368 = vmatmul.mubr.f32.gmra.mxu0 %v301
        %v369 = vpop.f32.mrf.mxu0
        %v370 = vadd.f32 0.0, %v369
        %v371 = vpop.f32.mrf.mxu0
        %372 = vdwg.mxu0
        %v373 = vlaneseq
        %v374 = vand.u32 %v373, 127
        %s375 = smul.u32 %s27, 128
        %s376 = ssub.s32 16, %s375
        %v377 = vstv %s376
        %vm378 = vcmp.lt.s32.totalorder %v374, %v377
        %v379 = vsel %vm378, 1, 0
        %vm380 = vcmp.eq.s32.totalorder %v379, 1
        %v381 = vsel %vm380, %v370, 0.0
        %v382 = vld [vmem:[%s3] sm:$0xff]
        %383 = vadd.xlane.f32.xlu0 %v381
        %v384 = vpop.xlane.xlu0 %383
        %v385 = vadd.f32 %v382, %v384
        %vm386 = vcmask 7168
        %387 = vst.msk [vmem:[%s3] sm:$0xff] %vm386, %v385
        %v388 = vld [vmem:[%s4] sm:$0xff]
        %v389 = vmul.f32 %v381, %v381
        %390 = vadd.xlane.f32.xlu0 %v389
        %v391 = vpop.xlane.xlu0 %390
        %v392 = vadd.f32 %v388, %v391
        %393 = vst.msk [vmem:[%s4] sm:$0xff] %vm386, %v392
        // Predicated region
        $region49: #{tpu_custom_call.1} parent=31 // pred_check
          %p394 = pneg %p126
        $region50: #{tpu_custom_call.1} parent=31 // pred_check_branch
          %396 = sbr.rel (%p394) target = $region52
        $region51: #{tpu_custom_call.1} parent=31 // pred_region
          _
        $region52: #{tpu_custom_call.1} parent=31 // pred_fallthru
          _
        // Predicated region
        $region53: #{tpu_custom_call.1} parent=31 // pred_check
          %p397 = pneg %p147
        $region54: #{tpu_custom_call.1} parent=31 // pred_check_branch
          %399 = sbr.rel (%p397) target = $region56
        $region55: #{tpu_custom_call.1} parent=31 // pred_region
          _
        $region56: #{tpu_custom_call.1} parent=31 // pred_fallthru
          _
        // Predicated region
        $region57: #{tpu_custom_call.1} parent=31 // pred_check
          %p400 = pneg %p126
        $region58: #{tpu_custom_call.1} parent=31 // pred_check_branch
          %402 = sbr.rel (%p400) target = $region60
        $region59: #{tpu_custom_call.1} parent=31 // pred_region
          _
        $region60: #{tpu_custom_call.1} parent=31 // pred_fallthru
          _
        // Predicated region
        $region61: #{tpu_custom_call.1} parent=31 // pred_check
          %p403 = pneg %p147
        $region62: #{tpu_custom_call.1} parent=31 // pred_check_branch
          %405 = sbr.rel (%p403) target = $region64
        $region63: #{tpu_custom_call.1} parent=31 // pred_region
          _
        $region64: #{tpu_custom_call.1} parent=31 // pred_fallthru
          _
      $region32: #{tpu_custom_call.1} parent=5 // pred_fallthru
        _
      %p406 = scmp.le.s32.totalorder 2, %s17
      // Predicated region
      $region65: #{tpu_custom_call.1} parent=5 // pred_check
        %p407 = pneg %p406
      $region66: #{tpu_custom_call.1} parent=5 // pred_check_branch
        %409 = sbr.rel (%p407) target = $region68
      $region67: #{tpu_custom_call.1} parent=5 // pred_region
        %s410 = ssub.s32 %s17, 2
      $region68: #{tpu_custom_call.1} parent=5 // pred_fallthru
        _
    $region6: #{tpu_custom_call.1} parent=1 // loop_footer
      %s21 = sadd.s32 1, %s17
    $region7: #{tpu_custom_call.1} parent=1 // loop_footer_branch
      %16 = sbr.rel target = $region3
    $region8: #{tpu_custom_call.1} parent=1 // loop_exit
      _
    %411 = vsyncpa [#allocation3], 1
    %s412 = scalar_lea.sflag [#allocation3], 1
    %413 = vsyncpa %s412, 1
    %414 = vsyncpa [#allocation5], 1
    %s415 = scalar_lea.sflag [#allocation5], 1
    %416 = vsyncpa %s415, 1

</llo_original>
